<compile_context>
chip_gen: v6e
topology: v6e:2x2x1
jax: 0.10.0
libtpu: 0.0.40
codegen_flags: <defaults>
</compile_context>

<pallas_src>
import re

import jax
import jax.numpy as jnp
from jax.experimental import pallas as pl
from jax.experimental.pallas import tpu as pltpu

LANES = 128
SUBLANES = 8


def _round_up(a, m):
    return ((a + m - 1) // m) * m


def _tpu_generation():
    try:
        kind = jax.devices()[0].device_kind.lower()
    except Exception:
        return 0
    m = re.search(r"(\d+)", kind)
    return int(m.group(1)) if m else 0


def _block_target_and_vmem_limit():
    """Per-generation (block_bytes, vmem_limit_bytes or None)."""
    gen = _tpu_generation()
    if gen >= 7:
        # v7x: ~3.2 TB/s HBM per TC -> need ~8 MiB blocks to amortize the
        # ~0.35 us per-step overhead. 8 MiB x 4 double-buffered = 32 MiB sits
        # exactly at the scoped default, so raise the limit explicitly
        # (physical VMEM is 64 MiB -> leave headroom).
        return 8 * 1024 * 1024, 40 * 1024 * 1024
    if gen == 6:
        # v6e: 5 MiB x 4 = 20 MiB fits the 32 MiB scoped default untouched.
        return 5 * 1024 * 1024, None
    # v5e (16 MiB scoped default) and unknown chips: conservative 2 MiB.
    return 2 * 1024 * 1024, None


def _rescale_kernel(scale_ref, x_ref, o_ref):
    # One vmul per vreg; the kernel is DMA-bound, VPU has huge slack.
    o_ref[...] = (x_ref[...] * scale_ref[0]).astype(o_ref.dtype)


def _pick_block_rows(rows, bytes_per_row, packing, target_bytes):
    """Rows per block: ~target_bytes, a multiple of `packing` (or full extent),
    preferring (a) >=2 grid steps so both v7x TensorCores get work,
    (b) an exact divisor of `rows` (no masked vst on the last block),
    (c) an even step count."""
    target = max(packing, (target_bytes // bytes_per_row) // packing * packing)

    if rows <= 2 * packing:
        return rows                                   # single full-extent block
    if rows <= 2 * target:
        # One or two target-size blocks cover the array: force two ~equal
        # blocks so a dual-TC chip gets a step per core.
        return min(rows, _round_up(pl.cdiv(rows, 2), packing))

    # Large array: snap to an exact divisor of rows near the byte target.
    best = None
    lo = _round_up(max(packing, target // 2), packing)
    hi = min(rows, 2 * target)
    r = lo
    while r <= hi:
        if rows % r == 0:
            steps = rows // r
            score = (steps % 2, abs(r - target))      # even steps first, then closest
            if best is None or score < best[0]:
                best = (score, r)
        r += packing
    if best is not None:
        return best[1]

    # No divisor in range: use the target; nudge the step count even if odd.
    steps = pl.cdiv(rows, target)
    if steps % 2 == 1:
        alt = _round_up(pl.cdiv(rows, steps + 1), packing)
        if alt >= packing:
            return alt
    return target


def rescale(x, scalar):
    """Computes scalar * x with a Pallas TPU kernel (floating-point x)."""
    orig_shape = x.shape
    dtype = x.dtype
    n = x.size
    if n == 0:
        return x
    if not jnp.issubdtype(dtype, jnp.floating):
        # TODO(synk): integer inputs follow jnp promotion (matches torch's
        # float-scalar * int-tensor -> float); no kernel needed for this edge.
        return scalar * x

    itemsize = jnp.dtype(dtype).itemsize
    packing = SUBLANES * max(1, 4 // itemsize)        # 8 f32 / 16 bf16 / 32 int8 rows
    target_bytes, vmem_limit = _block_target_and_vmem_limit()

    # Scalar rides SMEM: no recompile per distinct scalar value, and it stays
    # valid when `scalar` is a traced value under jit.
    scale_arr = jnp.asarray(scalar, dtype=jnp.float32).reshape((1,))
    scale_spec = pl.BlockSpec(memory_space=pltpu.MemorySpace.SMEM)

    cost = pl.CostEstimate(flops=n, transcendentals=0,
                           bytes_accessed=2 * n * itemsize)
    compiler_params = pltpu.CompilerParams(
        dimension_semantics=("parallel",),
        vmem_limit_bytes=vmem_limit,
    )

    x_flat = jnp.ravel(x)  # bitcast for default layouts; no HBM copy

    # Widest lane-dense last dim dividing n exactly -> no pad, no tail slice.
    width = next((w for w in (1024, 512, 256, LANES) if n % w == 0), None)

    if width is not None:
        rows = n // width
        block_rows = _pick_block_rows(rows, width * itemsize, packing, target_bytes)
        grid = (pl.cdiv(rows, block_rows),)
        out2d = pl.pallas_call(
            _rescale_kernel,
            out_shape=jax.ShapeDtypeStruct((rows, width), dtype),
            grid_spec=pl.GridSpec(
                grid=grid,
                in_specs=[scale_spec,
                          pl.BlockSpec((block_rows, width), lambda i: (i, 0))],
                out_specs=pl.BlockSpec((block_rows, width), lambda i: (i, 0)),
            ),
            compiler_params=compiler_params,
            cost_estimate=cost,
        )(scale_arr, x_flat.reshape(rows, width))
        return out2d.reshape(orig_shape)

    # Ragged size (n % 128 != 0, rare): masked 1-D cdiv grid -- no jnp.pad and
    # no output re-slice, so no extra HBM passes.
    tile_elems = packing * LANES                      # one packed (sublane, lane) tile
    block_elems = max(tile_elems,
                      (target_bytes // itemsize) // tile_elems * tile_elems)
    if n <= block_elems:
        block_elems = n                               # single full-extent block
    grid = (pl.cdiv(n, block_elems),)
    out1d = pl.pallas_call(
        _rescale_kernel,
        out_shape=jax.ShapeDtypeStruct((n,), dtype),
        grid_spec=pl.GridSpec(
            grid=grid,
            in_specs=[scale_spec, pl.BlockSpec((block_elems,), lambda i: (i,))],
            out_specs=pl.BlockSpec((block_elems,), lambda i: (i,)),
        ),
        compiler_params=compiler_params,
        cost_estimate=cost,
    )(scale_arr, x_flat)
    return out1d.reshape(orig_shape)


class Rescale:
    """JAX/Pallas equivalent of the PyTorch Rescale module."""

    def __init__(self, scalar):
        self.scalar = scalar

    def __call__(self, x):
        return rescale(x, self.scalar)

    def __repr__(self):
        return "Rescale(scalar={})".format(self.scalar)


if __name__ == "__main__":
    key = jax.random.PRNGKey(0)
    # NCHW input, small shapes: batch=2, channels=4, spatial=16
    x = jax.random.normal(key, (2, 4, 16, 16), dtype=jnp.float32)

    scalar = 2.5
    mod = Rescale(scalar)

    out = jax.block_until_ready(mod(x))
    ref = scalar * x
    assert out.shape == x.shape and out.dtype == x.dtype
    assert jnp.allclose(out, ref, rtol=1e-6, atol=1e-6)

    # Ragged-size sanity check (n % 128 != 0 path, no pad / slice).
    x2 = jax.random.normal(jax.random.PRNGKey(1), (7, 33), dtype=jnp.float32)
    out2 = jax.block_until_ready(mod(x2))
    assert out2.shape == x2.shape and out2.dtype == x2.dtype
    assert jnp.allclose(out2, scalar * x2, rtol=1e-6, atol=1e-6)

    print("KERNEL_OK")
</pallas_src>

<mosaic_0001>
module attributes {stable_mosaic.version = 11 : i64} {
  func.func @_rescale_kernel(%arg0: i32, %arg1: memref<1xf32, #tpu.memory_space<smem>>, %arg2: memref<2x1024xf32, #tpu.memory_space<vmem>>, %arg3: memref<2x1024xf32, #tpu.memory_space<vmem>>) attributes {dimension_semantics = [#tpu.dimension_semantics<parallel>], iteration_bounds = array<i64: 1>, scalar_prefetch = 0 : i64, scratch_operands = 0 : i64, tpu.core_type = #tpu.core_type<tc>, window_params = [{transform_indices = @transform_0, window_bounds = array<i64: 1>}, {transform_indices = @transform_1, window_bounds = array<i64: 2, 1024>}, {transform_indices = @transform_2, window_bounds = array<i64: 2, 1024>}]} {
    %c0 = arith.constant 0 : index
    %c0_0 = arith.constant 0 : index
    %0 = vector.load %arg2[%c0, %c0_0] : memref<2x1024xf32, #tpu.memory_space<vmem>>, vector<2x1024xf32>
    %c0_1 = arith.constant 0 : index
    %1 = memref.load %arg1[%c0_1] : memref<1xf32, #tpu.memory_space<smem>>
    %2 = vector.broadcast %1 : f32 to vector<2x1024xf32>
    %3 = arith.mulf %0, %2 : vector<2x1024xf32>
    %c0_2 = arith.constant 0 : index
    %c0_3 = arith.constant 0 : index
    %4 = vector.load %arg3[%c0_2, %c0_3] : memref<2x1024xf32, #tpu.memory_space<vmem>>, vector<2x1024xf32>
    tpu.vector_store %arg3[%c0_2, %c0_3], %3 {strides = array<i32>} : memref<2x1024xf32, #tpu.memory_space<vmem>>, vector<2x1024xf32>,
    return
  }
  func.func @transform_0(%arg0: i32) -> i32 {
    %c0_i32 = arith.constant 0 : i32
    %c0_i32_0 = arith.constant 0 : i32
    return %c0_i32 : i32
  }
  func.func @transform_1(%arg0: i32) -> (i32, i32) {
    %c0_i32 = arith.constant 0 : i32
    %c0_i32_0 = arith.constant 0 : i32
    return %arg0, %c0_i32 : i32, i32
  }
  func.func @transform_2(%arg0: i32) -> (i32, i32) {
    %c0_i32 = arith.constant 0 : i32
    %c0_i32_0 = arith.constant 0 : i32
    return %arg0, %c0_i32 : i32, i32
  }
}

</mosaic_0001>

<llo_original>
// kernel: tpu_custom_call.1
$region0: #{tpu_custom_call.1}
  #allocation0 [shape = 'u32[]', space=smem, size = 0x4, offset = 0x4, fixed_abs, tag = 'smem constant byte address 0x4 - core index']
  #allocation1 [shape = 'u32[144,128]{1,0:T(1,128)}', space=vmem, size = 0x12000, scoped, tag = 'internal scratch']
  #allocation2 [shape = 'f32[1]{0:T(128)S(6)}', space=smem, size = 0x200, scoped, tag = 'scoped memory for tpu_custom_call.1']
  %s0 = inlined_call_operand.<no memory space> [shape: f32[1], index: 0, kind: input, shape index: {}]
  %s1 = inlined_call_operand.hbm [shape: f32[2,1024], index: 1, kind: input, shape index: {}]
  %s2 = inlined_call_operand.hbm [shape: f32[2,1024], index: 2, kind: output, shape index: {}]
  %s3 = sld [smem:[#allocation0]]
  $region22: #{tpu_custom_call.1} parent=0
    _
  %s5 = ssub.s32 1, %s3
  %s6 = scalar_select 0, %s5, %s3
  %7 = sst [smem:[#allocation2]] %s0
  $region1: #{tpu_custom_call.1} parent=0
    #allocation3 [shape = 'u8[8192]{0}', space=vmem, size = 0x2000, scoped, tag = 'input window, operand 1, single buffered']
    #allocation4 [shape = 's32[1]{0}', space=sflag, size = 0x4, scoped, tag = 'scoped memory for tpu_custom_call.1']
    #allocation5 [shape = 's32[1]{0}', space=sflag, size = 0x4, scoped, tag = 'scoped memory for tpu_custom_call.1']
    #allocation6 [shape = 'u8[8192]{0}', space=vmem, size = 0x2000, scoped, tag = 'output window, operand 0, single buffered']
    %8 = vsyncpa [#allocation4], 0
    %9 = vsyncpa [#allocation5], 0
    // Predicated region
    $region2: #{tpu_custom_call.1} parent=1 // pred_check
      _
    $region3: #{tpu_custom_call.1} parent=1 // pred_check_branch
      %11 = sbr.rel (0) target = $region5
    $region4: #{tpu_custom_call.1} parent=1 // pred_region
      _
    $region5: #{tpu_custom_call.1} parent=1 // pred_fallthru
      _
    // Predicated region
    $region6: #{tpu_custom_call.1} parent=1 // pred_check
      _
    $region7: #{tpu_custom_call.1} parent=1 // pred_check_branch
      %13 = sbr.rel (0) target = $region9
    $region8: #{tpu_custom_call.1} parent=1 // pred_region
      %s15 = ssub.s32 256, 256
      %16 = vsyncadd [#allocation4], %s15
      %s18 = sshll.u32 [#allocation3], 4
      %s19 = int_to_ptr.vmem [resolvable:$true] %s18
      %21 = dma.hbm_to_vmem [thread:$0]  %s1, 256, %s19, [#allocation4]
    $region9: #{tpu_custom_call.1} parent=1 // pred_fallthru
      _
    // Predicated region
    $region10: #{tpu_custom_call.1} parent=1 // pred_check
      _
    $region11: #{tpu_custom_call.1} parent=1 // pred_check_branch
      %23 = sbr.rel (0) target = $region13
    $region12: #{tpu_custom_call.1} parent=1 // pred_region
      %24 = dma.done [#allocation4], 256
    $region13: #{tpu_custom_call.1} parent=1 // pred_fallthru
      _
    %v25 = vld [vmem:[#allocation3] sm:$0xff]
    %v26 = vld [vmem:[#allocation3 + $0x8] sm:$0xff]
    %s27 = sld [smem:[#allocation2]]
    %v28 = vstv %s27
    %v29 = vmul.f32 %v25, %v28
    %v30 = vmul.f32 %v26, %v28
    %31 = vst [vmem:[#allocation6] sm:$0xff] %v29
    %32 = vst [vmem:[#allocation6 + $0x8] sm:$0xff] %v30
    // Predicated region
    $region14: #{tpu_custom_call.1} parent=1 // pred_check
      _
    $region15: #{tpu_custom_call.1} parent=1 // pred_check_branch
      %34 = sbr.rel (0) target = $region17
    $region16: #{tpu_custom_call.1} parent=1 // pred_region
      %s36 = ssub.s32 256, 256
      %37 = vsyncadd [#allocation5], %s36
      %s39 = sshll.u32 [#allocation6], 4
      %s40 = int_to_ptr.vmem [resolvable:$true] %s39
      %42 = dma.vmem_to_hbm [thread:$0]  %s40, 256, %s2, [#allocation5]
    $region17: #{tpu_custom_call.1} parent=1 // pred_fallthru
      _
    // Predicated region
    $region18: #{tpu_custom_call.1} parent=1 // pred_check
      _
    $region19: #{tpu_custom_call.1} parent=1 // pred_check_branch
      %44 = sbr.rel (0) target = $region21
    $region20: #{tpu_custom_call.1} parent=1 // pred_region
      %45 = dma.done [#allocation5], 256
    $region21: #{tpu_custom_call.1} parent=1 // pred_fallthru
      _
    %46 = vsyncpa [#allocation4], 1
    %47 = vsyncpa [#allocation5], 1

</llo_original>
